<compile_context>
chip_gen: v7x
topology: tpu7x:2x2x1
jax: 0.10.0
libtpu: 0.0.40
codegen_flags: <defaults>
</compile_context>

<pallas_src>
import functools

import jax
import jax.numpy as jnp
from jax import lax
from jax.experimental import pallas as pl
from jax.experimental.pallas import tpu as pltpu


def _abs_pos_embed_kernel(lengths_ref, shifted_ref, row0_ref, out_ref, *, tb, seq_len):
    # lengths_ref : SMEM (bsz,) int32        -- per-batch valid length (attention_mask[i][0])
    # shifted_ref : VMEM (seq, embed_dim)    -- embedding_table[1 : seq+1]
    # row0_ref    : VMEM (1, embed_dim)      -- embedding_table[0]  (padding row)
    # out_ref     : VMEM (tb, seq, embed_dim)
    base = pl.program_id(0) * tb

    # grid-invariant within a step: hoist once
    j = lax.broadcasted_iota(jnp.int32, (seq_len, 1), 0)   # (seq, 1)
    shifted = shifted_ref[...]                             # (seq, embed_dim)
    row0 = row0_ref[...]                                   # (1, embed_dim)

    # static unroll over the TB batch rows of this step (tb <= 8)
    for t in range(tb):
        length = lengths_ref[base + t]                     # scalar from SMEM
        out_ref[t] = jnp.where(j < length, shifted, row0).astype(out_ref.dtype)


def abs_position_embedding(input_ids, attention_mask, embedding_table):
    """input_ids: (bsz, seq) — only its seq length is used (matches PyTorch forward).
    attention_mask: (bsz, seq) int — attention_mask[i, 0] holds the valid length.
    embedding_table: (max_position, embed_dim) float.
    Returns (bsz, seq, embed_dim)."""
    bsz, seq_len = input_ids.shape[0], input_ids.shape[1]
    max_position, embed_dim = embedding_table.shape

    # PyTorch nn.Embedding would raise on pos >= max_position; here pos in [0, seq].
    assert max_position >= seq_len + 1, "max_position must be >= seq_len + 1"
    # TODO(synk): lengths > seq_len would also fault in the PyTorch loop; here they
    # are implicitly clamped to seq_len (cannot be asserted on traced values).

    lengths = attention_mask[:, 0].astype(jnp.int32)

    # Only rows 0..seq of the table are ever referenced -> slice once in the wrapper
    # so the kernel DMAs (seq+1)*embed_dim*4B instead of the full table.
    shifted = lax.slice(embedding_table, (1, 0), (seq_len + 1, embed_dim))  # rows 1..seq
    row0 = lax.slice(embedding_table, (0, 0), (1, embed_dim))               # row 0

    # Batch rows per grid step: largest divisor of bsz among {8,4,2,1}.
    tb = 1
    for cand in (8, 4, 2):
        if bsz % cand == 0:
            tb = cand
            break
    num_blocks = bsz // tb

    kernel = functools.partial(_abs_pos_embed_kernel, tb=tb, seq_len=seq_len)

    return pl.pallas_call(
        kernel,
        out_shape=jax.ShapeDtypeStruct((bsz, seq_len, embed_dim), embedding_table.dtype),
        grid_spec=pltpu.PrefetchScalarGridSpec(
            num_scalar_prefetch=1,                       # `lengths` -> SMEM
            grid=(num_blocks,),
            in_specs=[
                pl.BlockSpec((seq_len, embed_dim), lambda b, lens: (0, 0)),  # shifted rows
                pl.BlockSpec((1, embed_dim), lambda b, lens: (0, 0)),        # row 0
            ],
            out_specs=pl.BlockSpec((tb, seq_len, embed_dim), lambda b, lens: (b, 0, 0)),
        ),
        compiler_params=pltpu.CompilerParams(dimension_semantics=("parallel",)),
    )(lengths, shifted, row0)


if __name__ == "__main__":
    key = jax.random.PRNGKey(0)
    k_table, k_ids = jax.random.split(key)

    # small shapes consistent with the module config
    bsz, seq, max_position, embed_dim = 2, 8, 16, 32

    # deterministic "learnable" embedding table (torch.nn.Embedding weight analogue)
    embedding_table = jax.random.normal(k_table, (max_position, embed_dim), jnp.float32)

    # input tokens (only shape[1] matters, as in the PyTorch forward)
    input_ids = jax.random.randint(k_ids, (bsz, seq), 0, 100, dtype=jnp.int32)

    # attention_mask: element [i, 0] carries the valid length, as consumed by the module
    lengths = jnp.array([5, 8], dtype=jnp.int32)
    attention_mask = jnp.zeros((bsz, seq), jnp.int32).at[:, 0].set(lengths)

    out = abs_position_embedding(input_ids, attention_mask, embedding_table)
    out = jax.block_until_ready(out)

    # pure-JAX reference of the PyTorch forward
    j = jnp.arange(seq)[None, :]
    pos_ref = jnp.where(j < lengths[:, None], j + 1, 0)
    ref = jnp.take(embedding_table, pos_ref, axis=0)

    assert out.shape == (bsz, seq, embed_dim)
    assert jnp.allclose(out, ref, atol=1e-5), "kernel output mismatch vs reference"
    print("KERNEL_OK")
</pallas_src>

<mosaic_0001>
module attributes {stable_mosaic.version = 11 : i64} {
  func.func @_abs_pos_embed_kernel(%arg0: i32, %arg1: memref<2xi32, #tpu.memory_space<smem>>, %arg2: memref<8x32xf32, #tpu.memory_space<vmem>>, %arg3: memref<1x32xf32, #tpu.memory_space<vmem>>, %arg4: memref<2x8x32xf32, #tpu.memory_space<vmem>>) attributes {dimension_semantics = [#tpu.dimension_semantics<parallel>], iteration_bounds = array<i64: 1>, scalar_prefetch = 1 : i64, scratch_operands = 0 : i64, tpu.core_type = #tpu.core_type<tc>, window_params = [{pipeline_mode = #tpu.pipeline_mode<synchronous>, transform_indices = @transform_0, window_bounds = array<i64: 8, 32>}, {pipeline_mode = #tpu.pipeline_mode<synchronous>, transform_indices = @transform_1, window_bounds = array<i64: 1, 32>}, {transform_indices = @transform_2, window_bounds = array<i64: 2, 8, 32>}]} {
    %c2_i32 = arith.constant 2 : i32
    %0 = arith.muli %arg0, %c2_i32 : i32
    %1 = tpu.iota {dimensions = array<i32: 0>} : vector<8x1xi32>
    %c0 = arith.constant 0 : index
    %c0_0 = arith.constant 0 : index
    %2 = vector.load %arg2[%c0, %c0_0] : memref<8x32xf32, #tpu.memory_space<vmem>>, vector<8x32xf32>
    %c0_1 = arith.constant 0 : index
    %c0_2 = arith.constant 0 : index
    %3 = vector.load %arg3[%c0_1, %c0_2] : memref<1x32xf32, #tpu.memory_space<vmem>>, vector<1x32xf32>
    %c0_i32 = arith.constant 0 : i32
    %4 = arith.addi %0, %c0_i32 : i32
    %5 = arith.index_cast %4 : i32 to index
    %6 = memref.load %arg1[%5] : memref<2xi32, #tpu.memory_space<smem>>
    %7 = vector.broadcast %6 : i32 to vector<8x1xi32>
    %8 = arith.cmpi slt, %1, %7 : vector<8x1xi32>
    %9 = vector.shape_cast %8 : vector<8x1xi1> to vector<8x1xi1>
    %10 = vector.broadcast %9 : vector<8x1xi1> to vector<8x32xi1>
    %11 = vector.shape_cast %3 : vector<1x32xf32> to vector<1x32xf32>
    %12 = vector.broadcast %11 : vector<1x32xf32> to vector<8x32xf32>
    %13 = arith.select %10, %2, %12 : vector<8x32xi1>, vector<8x32xf32>
    %c0_3 = arith.constant 0 : index
    %c0_4 = arith.constant 0 : index
    %c0_5 = arith.constant 0 : index
    %14 = vector.load %arg4[%c0_3, %c0_4, %c0_5] : memref<2x8x32xf32, #tpu.memory_space<vmem>>, vector<1x8x32xf32>
    %15 = vector.shape_cast %14 : vector<1x8x32xf32> to vector<8x32xf32>
    %16 = vector.shape_cast %13 : vector<8x32xf32> to vector<1x8x32xf32>
    tpu.vector_store %arg4[%c0_3, %c0_4, %c0_5], %16 {strides = array<i32>} : memref<2x8x32xf32, #tpu.memory_space<vmem>>, vector<1x8x32xf32>,
    %c1_i32 = arith.constant 1 : i32
    %17 = arith.addi %0, %c1_i32 : i32
    %18 = arith.index_cast %17 : i32 to index
    %19 = memref.load %arg1[%18] : memref<2xi32, #tpu.memory_space<smem>>
    %20 = vector.broadcast %19 : i32 to vector<8x1xi32>
    %21 = arith.cmpi slt, %1, %20 : vector<8x1xi32>
    %22 = vector.shape_cast %21 : vector<8x1xi1> to vector<8x1xi1>
    %23 = vector.broadcast %22 : vector<8x1xi1> to vector<8x32xi1>
    %24 = vector.shape_cast %3 : vector<1x32xf32> to vector<1x32xf32>
    %25 = vector.broadcast %24 : vector<1x32xf32> to vector<8x32xf32>
    %26 = arith.select %23, %2, %25 : vector<8x32xi1>, vector<8x32xf32>
    %c1 = arith.constant 1 : index
    %c0_6 = arith.constant 0 : index
    %c0_7 = arith.constant 0 : index
    %27 = vector.load %arg4[%c1, %c0_6, %c0_7] : memref<2x8x32xf32, #tpu.memory_space<vmem>>, vector<1x8x32xf32>
    %28 = vector.shape_cast %27 : vector<1x8x32xf32> to vector<8x32xf32>
    %29 = vector.shape_cast %26 : vector<8x32xf32> to vector<1x8x32xf32>
    tpu.vector_store %arg4[%c1, %c0_6, %c0_7], %29 {strides = array<i32>} : memref<2x8x32xf32, #tpu.memory_space<vmem>>, vector<1x8x32xf32>,
    return
  }
  func.func @transform_0(%arg0: i32, %arg1: memref<2xi32, #tpu.memory_space<smem>>) -> (i32, i32) {
    %c0_i32 = arith.constant 0 : i32
    %c0_i32_0 = arith.constant 0 : i32
    %c0_i32_1 = arith.constant 0 : i32
    return %c0_i32, %c0_i32_0 : i32, i32
  }
  func.func @transform_1(%arg0: i32, %arg1: memref<2xi32, #tpu.memory_space<smem>>) -> (i32, i32) {
    %c0_i32 = arith.constant 0 : i32
    %c0_i32_0 = arith.constant 0 : i32
    %c0_i32_1 = arith.constant 0 : i32
    return %c0_i32, %c0_i32_0 : i32, i32
  }
  func.func @transform_2(%arg0: i32, %arg1: memref<2xi32, #tpu.memory_space<smem>>) -> (i32, i32, i32) {
    %c0_i32 = arith.constant 0 : i32
    %c0_i32_0 = arith.constant 0 : i32
    %c0_i32_1 = arith.constant 0 : i32
    return %arg0, %c0_i32, %c0_i32_0 : i32, i32, i32
  }
}

</mosaic_0001>

<llo_original>
// kernel: tpu_custom_call.1
$region0: #{tpu_custom_call.1}
  #allocation0 [shape = 'u32[]', space=smem, size = 0x4, offset = 0x4, fixed_abs, tag = 'smem constant byte address 0x4 - core index']
  #allocation1 [shape = 'u32[144,128]{1,0:T(1,128)}', space=vmem, size = 0x12000, scoped, tag = 'internal scratch']
  #allocation2 [shape = 's32[1]{0}', space=sflag, size = 0x4, scoped, tag = 'scoped memory for tpu_custom_call.1']
  #allocation3 [shape = 'u8[512]{0}', space=smem, size = 0x200, scoped, tag = 'prefetched SMEM operand 0']
  %s0 = inlined_call_operand.hbm [shape: s32[2], index: 0, kind: input, shape index: {}]
  %s1 = inlined_call_operand.hbm [shape: f32[8,32], index: 1, kind: input, shape index: {}]
  %s2 = inlined_call_operand.vmem [shape: f32[1,32], index: 2, kind: input, shape index: {}]
  %s3 = inlined_call_operand.hbm [shape: f32[2,8,32], index: 3, kind: output, shape index: {}]
  %s4 = sld [smem:[#allocation0]]
  $region22: #{tpu_custom_call.1} parent=0
    _
  %s6 = ssub.s32 1, %s4
  %s7 = scalar_select 0, %s6, %s4
  %9 = dma.hbm_to_smem %s0, 16, [#allocation3], [#allocation2]
  %10 = dma.done [#allocation2], 16
  %11 = sfence
  $region1: #{tpu_custom_call.1} parent=0
    #allocation4 [shape = 'u8[4096]{0}', space=vmem, size = 0x1000, scoped, tag = 'input window, operand 1, single buffered']
    #allocation5 [shape = 's32[1]{0}', space=sflag, size = 0x4, scoped, tag = 'scoped memory for tpu_custom_call.1']
    #allocation6 [shape = 's32[1]{0}', space=sflag, size = 0x4, scoped, tag = 'scoped memory for tpu_custom_call.1']
    #allocation7 [shape = 'u8[8192]{0}', space=vmem, size = 0x2000, scoped, tag = 'output window, operand 0, single buffered']
    %12 = vsyncpa [#allocation5], 0
    %13 = vsyncpa [#allocation6], 0
    // Predicated region
    $region2: #{tpu_custom_call.1} parent=1 // pred_check
      _
    $region3: #{tpu_custom_call.1} parent=1 // pred_check_branch
      %15 = sbr.rel (0) target = $region5
    $region4: #{tpu_custom_call.1} parent=1 // pred_region
      %s17 = ssub.s32 128, 128
      %18 = vsyncadd [#allocation5], %s17
      %s20 = sshll.u32 [#allocation4], 4
      %s21 = int_to_ptr.vmem [resolvable:$true] %s20
      %23 = dma.hbm_to_vmem [thread:$0]  %s1, 128, %s21, [#allocation5]
    $region5: #{tpu_custom_call.1} parent=1 // pred_fallthru
      _
    // Predicated region
    $region6: #{tpu_custom_call.1} parent=1 // pred_check
      _
    $region7: #{tpu_custom_call.1} parent=1 // pred_check_branch
      %25 = sbr.rel (0) target = $region9
    $region8: #{tpu_custom_call.1} parent=1 // pred_region
      _
    $region9: #{tpu_custom_call.1} parent=1 // pred_fallthru
      _
    // Predicated region
    $region10: #{tpu_custom_call.1} parent=1 // pred_check
      _
    $region11: #{tpu_custom_call.1} parent=1 // pred_check_branch
      %27 = sbr.rel (0) target = $region13
    $region12: #{tpu_custom_call.1} parent=1 // pred_region
      %28 = dma.done [#allocation5], 128
    $region13: #{tpu_custom_call.1} parent=1 // pred_fallthru
      _
    %s29 = smul.u32 0, 2
    %v30 = vlaneseq
    %v31 = vshrl.u32 %v30, 7
    %v32 = vld [vmem:[#allocation4] sm:$0xff]
    %v33 = vld [vmem:[%s2] sm:$0x1]
    %s34 = sld [smem:[#allocation3 + %s29]]
    %v35 = vstv %s34
    %vm36 = vcmp.lt.s32.totalorder %v31, %v35
    %v37 = vsel %vm36, 1, 0
    %vm38 = vcmp.eq.s32.totalorder %v37, 1
    %v40 = vlaneseq
    %v41 = vshrl.u32 %v40, 7
    %v42 = vsub.s32 0, %v41
    %v43 = vrot.slane %v33, %v42
    %v45 = vsel %vm38, %v32, %v43
    %vm46 = vcmask 261120
    %47 = vst.msk [vmem:[#allocation7] sm:$0xff] %vm46, %v45
    %s48 = sadd.s32 %s29, 1
    %s49 = sld [smem:[#allocation3 + %s48]]
    %v50 = vstv %s49
    %vm51 = vcmp.lt.s32.totalorder %v31, %v50
    %v52 = vsel %vm51, 1, 0
    %vm53 = vcmp.eq.s32.totalorder %v52, 1
    %v54 = vsel %vm53, %v32, %v43
    %s55 = scalar_lea.vmem [#allocation7], 8
    %56 = vst.msk [vmem:[%s55] sm:$0xff] %vm46, %v54
    // Predicated region
    $region14: #{tpu_custom_call.1} parent=1 // pred_check
      _
    $region15: #{tpu_custom_call.1} parent=1 // pred_check_branch
      %58 = sbr.rel (0) target = $region17
    $region16: #{tpu_custom_call.1} parent=1 // pred_region
      %s60 = ssub.s32 256, 256
      %61 = vsyncadd [#allocation6], %s60
      %s62 = sshll.u32 [#allocation7], 4
      %s63 = int_to_ptr.vmem [resolvable:$true] %s62
      %68 = dma.vmem_to_hbm [thread:$0]  %s63, 256, %s3, [#allocation6], 128, 128, 8
    $region17: #{tpu_custom_call.1} parent=1 // pred_fallthru
      _
    // Predicated region
    $region18: #{tpu_custom_call.1} parent=1 // pred_check
      _
    $region19: #{tpu_custom_call.1} parent=1 // pred_check_branch
      %70 = sbr.rel (0) target = $region21
    $region20: #{tpu_custom_call.1} parent=1 // pred_region
      %71 = dma.done [#allocation6], 256
    $region21: #{tpu_custom_call.1} parent=1 // pred_fallthru
      _
    %72 = vsyncpa [#allocation5], 1
    %73 = vsyncpa [#allocation6], 1

</llo_original>
